<compile_context>
chip_gen: v7x
topology: tpu7x:2x2x1
jax: 0.10.0
libtpu: 0.0.40
codegen_flags: <defaults>
</compile_context>

<pallas_src>
import jax
import jax.numpy as jnp
from jax import lax
from jax.experimental import pallas as pl
from jax.experimental.pallas import tpu as pltpu

OUT_HW = 224         # F.interpolate target size
NUM_CLASSES = 10
NUM_NETS = 2         # len(classifier_nets)
ALPHA = 1.0
BETA = 1.0


# --------------------------------------------------------------------------
# Bilinear resize matrix (mode='bilinear', align_corners=False), used only to
# fold the interpolation into the linear classifier weights at setup time.
# --------------------------------------------------------------------------
def _bilinear_matrix(in_size: int, out_size: int) -> jnp.ndarray:
    """Interpolation matrix M with out = M @ in along one axis, matching
    PyTorch F.interpolate bilinear, align_corners=False."""
    i = jnp.arange(out_size, dtype=jnp.float32)
    scale = in_size / out_size
    src = (i + 0.5) * scale - 0.5
    src = jnp.maximum(src, 0.0)                      # PyTorch clamps negatives to 0
    i0 = jnp.clip(jnp.floor(src).astype(jnp.int32), 0, in_size - 1)
    i1 = jnp.minimum(i0 + 1, in_size - 1)
    lam = src - i0.astype(jnp.float32)
    cols = jnp.arange(in_size)[None, :]
    m = ((1.0 - lam)[:, None] * (cols == i0[:, None]).astype(jnp.float32) +
         lam[:, None] * (cols == i1[:, None]).astype(jnp.float32))
    return m.astype(jnp.float32)


def fold_classifier_weights(weights, C, H, W):
    """One-time offline fold:  logits(flat(resize(x))) == flat(x) @ W_eff.

    weights: (NUM_NETS, C*224*224, NUM_CLASSES) linear head over the flattened
             resized image (index order c, i, j).
    returns: (NUM_NETS, NUM_CLASSES, C*H*W)  lane-dense effective weights over
             the flattened ORIGINAL image (index order c, h, w).
    """
    wh = _bilinear_matrix(H, OUT_HW)           # (224, H)
    ww = _bilinear_matrix(W, OUT_HW)           # (224, W)
    w5 = weights.reshape(NUM_NETS, C, OUT_HW, OUT_HW, NUM_CLASSES)
    w_eff = jnp.einsum('ih,jw,ncijk->nkchw', wh, ww, w5)
    return w_eff.reshape(NUM_NETS, NUM_CLASSES, C * H * W).astype(jnp.float32)


# --------------------------------------------------------------------------
# Classifier logits: one NT matmul per net, x and x_hat stacked along rows.
# --------------------------------------------------------------------------
def _cls_kernel(x_ref, wt_ref, o_ref):
    # x_ref: (2B, K)   wt_ref: (NUM_CLASSES, K)   o_ref: (2B, NUM_CLASSES)
    o_ref[...] = lax.dot_general(
        x_ref[...], wt_ref[...],
        dimension_numbers=(((1,), (1,)), ((), ())),
        preferred_element_type=jnp.float32)


def classifier_logits(x_stack, w_eff_t):
    # x_stack: (2B, K) float32;  w_eff_t: (NUM_NETS, NUM_CLASSES, K) float32
    M, K = x_stack.shape
    return pl.pallas_call(
        _cls_kernel,
        out_shape=jax.ShapeDtypeStruct((NUM_NETS, M, NUM_CLASSES), jnp.float32),
        grid_spec=pltpu.PrefetchScalarGridSpec(
            num_scalar_prefetch=0,
            grid=(NUM_NETS,),
            in_specs=[
                pl.BlockSpec((M, K), lambda n: (0, 0)),
                pl.BlockSpec((None, NUM_CLASSES, K), lambda n: (n, 0, 0)),
            ],
            out_specs=pl.BlockSpec((None, M, NUM_CLASSES), lambda n: (n, 0, 0)),
        ),
        compiler_params=pltpu.CompilerParams(
            dimension_semantics=("parallel",)),   # nets shard across TCs on v7x
    )(x_stack, w_eff_t)


# --------------------------------------------------------------------------
# loss2 + loss3 (per-batch partials computed in-kernel; tiny batch-mean = glue)
# --------------------------------------------------------------------------
def _loss23_kernel(c_ref, e_ref, l2_ref, l3_ref):
    c = c_ref[...]                                        # (B, HW)
    # e_ref is (3, B, HW): leading-dim indexing is free (no relayout copies).
    ech = (jnp.abs(e_ref[0]) / 3.0 +
           jnp.abs(e_ref[1]) / 3.0 +
           jnp.abs(e_ref[2]) / 3.0)                       # (B, HW)

    # loss2 per-batch term
    I = jnp.mean(c, axis=1, keepdims=True)                # mean over (1,2,3) of c
    N = 1.0 - I
    N0 = jnp.mean(ech, axis=1, keepdims=True)             # mean over (H, W)
    q = 1e-10
    l2_ref[...] = jnp.log((N * N + N0 * N0 + q) / (2.0 * N * N0 + q))

    # loss3 per-batch term: softmax over flattened c, weighted sum of |e| avg
    cmax = jnp.max(c, axis=1, keepdims=True)
    ex = jnp.exp(c - cmax)
    v = ex / jnp.sum(ex, axis=1, keepdims=True)
    l3_ref[...] = jnp.sum(v * ech, axis=1, keepdims=True)


def loss23_per_batch(c, e):
    B = c.shape[0]
    assert c.shape[1] == 1, "loss3 requires c with a single channel"
    HW = c.shape[2] * c.shape[3]
    c_flat = c.reshape(B, HW).astype(jnp.float32)
    # put the 3-channel axis leading so the kernel indexes it for free
    e_3bf = jnp.transpose(e, (1, 0, 2, 3)).reshape(3, B, HW).astype(jnp.float32)
    # NOTE: at large B/HW this should be tiled over B with "parallel" semantics;
    # at these shapes a single full-block invocation is fastest and safest.
    l2pb, l3pb = pl.pallas_call(
        _loss23_kernel,
        out_shape=(jax.ShapeDtypeStruct((B, 1), jnp.float32),
                   jax.ShapeDtypeStruct((B, 1), jnp.float32)),
        grid_spec=pltpu.PrefetchScalarGridSpec(
            num_scalar_prefetch=0,
            grid=(1,),
            in_specs=[
                pl.BlockSpec((B, HW), lambda i: (0, 0)),
                pl.BlockSpec((3, B, HW), lambda i: (0, 0, 0)),
            ],
            out_specs=[
                pl.BlockSpec((B, 1), lambda i: (0, 0)),
                pl.BlockSpec((B, 1), lambda i: (0, 0)),
            ],
        ),
    )(c_flat, e_3bf)
    return l2pb[:, 0], l3pb[:, 0]


# --------------------------------------------------------------------------
# Full forward
# --------------------------------------------------------------------------
def _cross_entropy(logits, labels):
    # nn.CrossEntropyLoss() default: mean over batch of (logsumexp - logit[label])
    lse = jax.nn.logsumexp(logits, axis=-1)
    picked = jnp.take_along_axis(logits, labels[:, None], axis=-1)[:, 0]
    return jnp.mean(lse - picked)


def loss_forward(x, x_hat, c, e, w_eff_t, biases, alpha=ALPHA, beta=BETA):
    B, C, H, W = x.shape
    K = C * H * W

    # ----- loss1: folded resize+classifier, x / x_hat stacked along rows -----
    x_stack = jnp.concatenate(
        [x.reshape(B, K), x_hat.reshape(B, K)], axis=0).astype(jnp.float32)
    logits = classifier_logits(x_stack, w_eff_t)          # (NUM_NETS, 2B, NC)
    logits = logits + biases[:, None, :]
    sx, sxh = logits[:, :B, :], logits[:, B:, :]
    loss1 = 0.0
    for n in range(NUM_NETS):
        labels = jnp.argmax(sx[n], axis=1)                # Ln = Sn.argmax(dim=1)
        loss1 = loss1 + _cross_entropy(sxh[n], labels)
    loss1 = loss1 / NUM_NETS

    # ----- loss2 / loss3 -----
    l2pb, l3pb = loss23_per_batch(c, e)
    loss2 = alpha * jnp.mean(l2pb)
    loss3 = beta * jnp.mean(l3pb)

    loss = loss1 + loss2 + loss3
    return loss, loss1, loss2, loss3


if __name__ == "__main__":
    key = jax.random.PRNGKey(0)
    kx, kxh, kc, ke, kw, kb = jax.random.split(key, 6)

    B, C, H, W = 2, 3, 16, 16
    x = jax.random.normal(kx, (B, C, H, W), dtype=jnp.float32)
    x_hat = x + 0.1 * jax.random.normal(kxh, (B, C, H, W), dtype=jnp.float32)
    c = jax.nn.sigmoid(jax.random.normal(kc, (B, 1, H, W), dtype=jnp.float32))
    e = jax.random.normal(ke, (B, 3, H, W), dtype=jnp.float32)

    # deterministic synthetic classifier parameters: linear heads over the
    # flattened 224x224 resized image (same semantics as the original module
    # call net(interpolate(x)) for a linear net).
    K224 = C * OUT_HW * OUT_HW
    weights = 0.01 * jax.random.normal(kw, (NUM_NETS, K224, NUM_CLASSES),
                                       dtype=jnp.float32)
    biases = 0.01 * jax.random.normal(kb, (NUM_NETS, NUM_CLASSES),
                                      dtype=jnp.float32)

    # one-time OFFLINE fold of the bilinear interpolation into the weights
    w_eff_t = jax.block_until_ready(fold_classifier_weights(weights, C, H, W))

    out = jax.jit(loss_forward)(x, x_hat, c, e, w_eff_t, biases)
    out = jax.block_until_ready(out)
    total, l1, l2, l3 = out
    assert all(jnp.isfinite(v) for v in (total, l1, l2, l3))
    print("KERNEL_OK")
</pallas_src>

<mosaic_0001>
module attributes {stable_mosaic.version = 11 : i64} {
  func.func @_cls_kernel(%arg0: i32, %arg1: memref<4x768xf32, #tpu.memory_space<vmem>>, %arg2: memref<1x10x768xf32, #tpu.memory_space<vmem>>, %arg3: memref<1x4x10xf32, #tpu.memory_space<vmem>>) attributes {dimension_semantics = [#tpu.dimension_semantics<parallel>], iteration_bounds = array<i64: 2>, scalar_prefetch = 0 : i64, scratch_operands = 0 : i64, tpu.core_type = #tpu.core_type<tc>, window_params = [{pipeline_mode = #tpu.pipeline_mode<synchronous>, transform_indices = @transform_0, window_bounds = array<i64: 4, 768>}, {transform_indices = @transform_1, window_bounds = array<i64: 1, 10, 768>}, {transform_indices = @transform_2, window_bounds = array<i64: 1, 4, 10>}]} {
    %c0 = arith.constant 0 : index
    %c0_0 = arith.constant 0 : index
    %0 = vector.load %arg1[%c0, %c0_0] : memref<4x768xf32, #tpu.memory_space<vmem>>, vector<4x768xf32>
    %c0_1 = arith.constant 0 : index
    %c0_2 = arith.constant 0 : index
    %c0_3 = arith.constant 0 : index
    %1 = vector.load %arg2[%c0_1, %c0_2, %c0_3] : memref<1x10x768xf32, #tpu.memory_space<vmem>>, vector<1x10x768xf32>
    %2 = vector.shape_cast %1 : vector<1x10x768xf32> to vector<10x768xf32>
    %cst = arith.constant dense<0.000000e+00> : vector<4x10xf32>
    %3 = tpu.matmul %0, %2, %cst {dimension_numbers = #tpu.dot_dimension_numbers<[1], [1], [0], [0], [0, 0, 1, 0], [], []>} : vector<4x768xf32>, vector<10x768xf32>, vector<4x10xf32> -> vector<4x10xf32>
    %c0_4 = arith.constant 0 : index
    %c0_5 = arith.constant 0 : index
    %c0_6 = arith.constant 0 : index
    %4 = vector.load %arg3[%c0_4, %c0_5, %c0_6] : memref<1x4x10xf32, #tpu.memory_space<vmem>>, vector<1x4x10xf32>
    %5 = vector.shape_cast %4 : vector<1x4x10xf32> to vector<4x10xf32>
    %6 = vector.shape_cast %3 : vector<4x10xf32> to vector<1x4x10xf32>
    tpu.vector_store %arg3[%c0_4, %c0_5, %c0_6], %6 {strides = array<i32>} : memref<1x4x10xf32, #tpu.memory_space<vmem>>, vector<1x4x10xf32>,
    return
  }
  func.func @transform_0(%arg0: i32) -> (i32, i32) {
    %c0_i32 = arith.constant 0 : i32
    %c0_i32_0 = arith.constant 0 : i32
    %c0_i32_1 = arith.constant 0 : i32
    return %c0_i32, %c0_i32_0 : i32, i32
  }
  func.func @transform_1(%arg0: i32) -> (i32, i32, i32) {
    %c0_i32 = arith.constant 0 : i32
    %c0_i32_0 = arith.constant 0 : i32
    %c0_i32_1 = arith.constant 0 : i32
    return %arg0, %c0_i32, %c0_i32_0 : i32, i32, i32
  }
  func.func @transform_2(%arg0: i32) -> (i32, i32, i32) {
    %c0_i32 = arith.constant 0 : i32
    %c0_i32_0 = arith.constant 0 : i32
    %c0_i32_1 = arith.constant 0 : i32
    return %arg0, %c0_i32, %c0_i32_0 : i32, i32, i32
  }
}

module attributes {stable_mosaic.version = 11 : i64} {
  func.func @_loss23_kernel(%arg0: i32, %arg1: memref<2x256xf32, #tpu.memory_space<vmem>>, %arg2: memref<3x2x256xf32, #tpu.memory_space<vmem>>, %arg3: memref<2x1xf32, #tpu.memory_space<vmem>>, %arg4: memref<2x1xf32, #tpu.memory_space<vmem>>) attributes {dimension_semantics = [#tpu.dimension_semantics<arbitrary>], iteration_bounds = array<i64: 1>, scalar_prefetch = 0 : i64, scratch_operands = 0 : i64, tpu.core_type = #tpu.core_type<tc>, window_params = [{pipeline_mode = #tpu.pipeline_mode<synchronous>, transform_indices = @transform_0, window_bounds = array<i64: 2, 256>}, {pipeline_mode = #tpu.pipeline_mode<synchronous>, transform_indices = @transform_1, window_bounds = array<i64: 3, 2, 256>}, {pipeline_mode = #tpu.pipeline_mode<synchronous>, transform_indices = @transform_2, window_bounds = array<i64: 2, 1>}, {pipeline_mode = #tpu.pipeline_mode<synchronous>, transform_indices = @transform_3, window_bounds = array<i64: 2, 1>}]} {
    %c0 = arith.constant 0 : index
    %c0_0 = arith.constant 0 : index
    %0 = vector.load %arg1[%c0, %c0_0] : memref<2x256xf32, #tpu.memory_space<vmem>>, vector<2x256xf32>
    %c0_1 = arith.constant 0 : index
    %c0_2 = arith.constant 0 : index
    %c0_3 = arith.constant 0 : index
    %1 = vector.load %arg2[%c0_1, %c0_2, %c0_3] : memref<3x2x256xf32, #tpu.memory_space<vmem>>, vector<1x2x256xf32>
    %2 = vector.shape_cast %1 : vector<1x2x256xf32> to vector<2x256xf32>
    %3 = math.absf %2 : vector<2x256xf32>
    %cst = arith.constant 3.000000e+00 : f32
    %4 = vector.broadcast %cst : f32 to vector<2x256xf32>
    %5 = arith.divf %3, %4 : vector<2x256xf32>
    %c1 = arith.constant 1 : index
    %c0_4 = arith.constant 0 : index
    %c0_5 = arith.constant 0 : index
    %6 = vector.load %arg2[%c1, %c0_4, %c0_5] : memref<3x2x256xf32, #tpu.memory_space<vmem>>, vector<1x2x256xf32>
    %7 = vector.shape_cast %6 : vector<1x2x256xf32> to vector<2x256xf32>
    %8 = math.absf %7 : vector<2x256xf32>
    %cst_6 = arith.constant 3.000000e+00 : f32
    %9 = vector.broadcast %cst_6 : f32 to vector<2x256xf32>
    %10 = arith.divf %8, %9 : vector<2x256xf32>
    %11 = arith.addf %5, %10 : vector<2x256xf32>
    %c2 = arith.constant 2 : index
    %c0_7 = arith.constant 0 : index
    %c0_8 = arith.constant 0 : index
    %12 = vector.load %arg2[%c2, %c0_7, %c0_8] : memref<3x2x256xf32, #tpu.memory_space<vmem>>, vector<1x2x256xf32>
    %13 = vector.shape_cast %12 : vector<1x2x256xf32> to vector<2x256xf32>
    %14 = math.absf %13 : vector<2x256xf32>
    %cst_9 = arith.constant 3.000000e+00 : f32
    %15 = vector.broadcast %cst_9 : f32 to vector<2x256xf32>
    %16 = arith.divf %14, %15 : vector<2x256xf32>
    %17 = arith.addf %11, %16 : vector<2x256xf32>
    %cst_10 = arith.constant dense<0.000000e+00> : vector<2xf32>
    %18 = vector.multi_reduction <add>, %0, %cst_10 [1] : vector<2x256xf32> to vector<2xf32>
    %19 = vector.shape_cast %18 : vector<2xf32> to vector<2x1xf32>
    %cst_11 = arith.constant 2.560000e+02 : f32
    %20 = vector.broadcast %cst_11 : f32 to vector<2x1xf32>
    %21 = arith.divf %19, %20 : vector<2x1xf32>
    %cst_12 = arith.constant 1.000000e+00 : f32
    %22 = vector.broadcast %cst_12 : f32 to vector<2x1xf32>
    %23 = arith.subf %22, %21 : vector<2x1xf32>
    %cst_13 = arith.constant dense<0.000000e+00> : vector<2xf32>
    %24 = vector.multi_reduction <add>, %17, %cst_13 [1] : vector<2x256xf32> to vector<2xf32>
    %25 = vector.shape_cast %24 : vector<2xf32> to vector<2x1xf32>
    %cst_14 = arith.constant 2.560000e+02 : f32
    %26 = vector.broadcast %cst_14 : f32 to vector<2x1xf32>
    %27 = arith.divf %25, %26 : vector<2x1xf32>
    %28 = arith.mulf %23, %23 : vector<2x1xf32>
    %29 = arith.mulf %27, %27 : vector<2x1xf32>
    %30 = arith.addf %28, %29 : vector<2x1xf32>
    %cst_15 = arith.constant 1.000000e-10 : f32
    %31 = vector.broadcast %cst_15 : f32 to vector<2x1xf32>
    %32 = arith.addf %30, %31 : vector<2x1xf32>
    %cst_16 = arith.constant 2.000000e+00 : f32
    %33 = vector.broadcast %cst_16 : f32 to vector<2x1xf32>
    %34 = arith.mulf %33, %23 : vector<2x1xf32>
    %35 = arith.mulf %34, %27 : vector<2x1xf32>
    %cst_17 = arith.constant 1.000000e-10 : f32
    %36 = vector.broadcast %cst_17 : f32 to vector<2x1xf32>
    %37 = arith.addf %35, %36 : vector<2x1xf32>
    %38 = arith.divf %32, %37 : vector<2x1xf32>
    %39 = math.log %38 : vector<2x1xf32>
    %c0_18 = arith.constant 0 : index
    %c0_19 = arith.constant 0 : index
    %40 = vector.load %arg3[%c0_18, %c0_19] : memref<2x1xf32, #tpu.memory_space<vmem>>, vector<2x1xf32>
    tpu.vector_store %arg3[%c0_18, %c0_19], %39 {strides = array<i32>} : memref<2x1xf32, #tpu.memory_space<vmem>>, vector<2x1xf32>,
    %cst_20 = arith.constant dense<0xFF800000> : vector<2xf32>
    %41 = vector.multi_reduction <maximumf>, %0, %cst_20 [1] : vector<2x256xf32> to vector<2xf32>
    %42 = vector.shape_cast %41 : vector<2xf32> to vector<2x1xf32>
    %43 = vector.broadcast %42 : vector<2x1xf32> to vector<2x256xf32>
    %44 = arith.subf %0, %43 : vector<2x256xf32>
    %45 = math.exp %44 : vector<2x256xf32>
    %cst_21 = arith.constant dense<0.000000e+00> : vector<2xf32>
    %46 = vector.multi_reduction <add>, %45, %cst_21 [1] : vector<2x256xf32> to vector<2xf32>
    %47 = vector.shape_cast %46 : vector<2xf32> to vector<2x1xf32>
    %48 = vector.broadcast %47 : vector<2x1xf32> to vector<2x256xf32>
    %49 = arith.divf %45, %48 : vector<2x256xf32>
    %50 = arith.mulf %49, %17 : vector<2x256xf32>
    %cst_22 = arith.constant dense<0.000000e+00> : vector<2xf32>
    %51 = vector.multi_reduction <add>, %50, %cst_22 [1] : vector<2x256xf32> to vector<2xf32>
    %52 = vector.shape_cast %51 : vector<2xf32> to vector<2x1xf32>
    %c0_23 = arith.constant 0 : index
    %c0_24 = arith.constant 0 : index
    %53 = vector.load %arg4[%c0_23, %c0_24] : memref<2x1xf32, #tpu.memory_space<vmem>>, vector<2x1xf32>
    tpu.vector_store %arg4[%c0_23, %c0_24], %52 {strides = array<i32>} : memref<2x1xf32, #tpu.memory_space<vmem>>, vector<2x1xf32>,
    return
  }
  func.func @transform_0(%arg0: i32) -> (i32, i32) {
    %c0_i32 = arith.constant 0 : i32
    %c0_i32_0 = arith.constant 0 : i32
    %c0_i32_1 = arith.constant 0 : i32
    return %c0_i32, %c0_i32_0 : i32, i32
  }
  func.func @transform_1(%arg0: i32) -> (i32, i32, i32) {
    %c0_i32 = arith.constant 0 : i32
    %c0_i32_0 = arith.constant 0 : i32
    %c0_i32_1 = arith.constant 0 : i32
    %c0_i32_2 = arith.constant 0 : i32
    return %c0_i32, %c0_i32_0, %c0_i32_1 : i32, i32, i32
  }
  func.func @transform_2(%arg0: i32) -> (i32, i32) {
    %c0_i32 = arith.constant 0 : i32
    %c0_i32_0 = arith.constant 0 : i32
    %c0_i32_1 = arith.constant 0 : i32
    return %c0_i32, %c0_i32_0 : i32, i32
  }
  func.func @transform_3(%arg0: i32) -> (i32, i32) {
    %c0_i32 = arith.constant 0 : i32
    %c0_i32_0 = arith.constant 0 : i32
    %c0_i32_1 = arith.constant 0 : i32
    return %c0_i32, %c0_i32_0 : i32, i32
  }
}

</mosaic_0001>

<llo_original>
// kernel: loss_forward.2
$region0: #{loss_forward.2}
  #allocation0 [shape = 'u32[]', space=smem, size = 0x4, offset = 0x4, fixed_abs, tag = 'smem constant byte address 0x4 - core index']
  #allocation1 [shape = 'u32[144,128]{1,0:T(1,128)}', space=vmem, size = 0x12000, scoped, tag = 'internal scratch']
  %s0 = inlined_call_operand.vmem [shape: f32[4,768], index: 0, kind: input, shape index: {}]
  %s1 = inlined_call_operand.vmem [shape: f32[2,10,768], index: 1, kind: input, shape index: {}]
  %s2 = inlined_call_operand.vmem [shape: f32[2,4,10], index: 2, kind: output, shape index: {}]
  %s3 = sld [smem:[#allocation0]]
  $region41: #{loss_forward.2} parent=0
    _
  %s5 = ssub.s32 1, %s3
  %s6 = scalar_select 0, %s5, %s3
  loop: start=0, step=1, limit=4
  $region2: #{loss_forward.2} parent=0 // loop_pre_header
    _
  $region3: #{loss_forward.2} parent=0 // loop_header
    %s8 = sphi 0, %s12
    %p9 = scmp.ge.s32.totalorder %s8, 4
    %s16 = sphi 0, %s16
    %s18 = sphi 0, %s16
    %s19 = sphi 0, %s18
    %s33 = sphi 0, %s19
    %s39 = sphi 0, %s41
    %s42 = sphi 0, %s39
    %s43 = sphi 0, %s42
    %s59 = sphi 0, %s43
    %s65 = sphi 0, %s67
    %s68 = sphi 0, %s65
    %s69 = sphi 0, %s68
    %s85 = sphi 0, %s69
  $region4: #{loss_forward.2} parent=0 // loop_header_branch
    %11 = sbr.rel (%p9) target = $region8
  $region5: #{loss_forward.2} parent=0 // loop_body
    %s13 = ssub.s32 %s8, 1
    %s14 = ssub.s32 %s8, 2
    %s15 = sadd.s32 %s8, 1
    %s17 = sadd.s32 %s16, 1
    %p20 = scmp.eq.s32.totalorder %s8, 1
    %p21 = scmp.ne.s32.totalorder %s16, %s18
    %p22 = scmp.eq.s32.totalorder %s8, 0
    %p23 = por %p21, %p22
    %p24 = scmp.ne.s32.totalorder %s16, %s18
    %p25 = scmp.eq.s32.totalorder %s13, 1
    %p26 = por %p24, %p25
    %p27 = scmp.ne.s32.totalorder %s18, %s19
    %p28 = scmp.eq.s32.totalorder %s13, 0
    %p29 = por %p27, %p28
    %p30 = scmp.ne.s32.totalorder %s18, %s19
    %p31 = scmp.eq.s32.totalorder %s14, 1
    %p32 = por %p30, %p31
    %p34 = scmp.ne.s32.totalorder %s19, %s33
    %p35 = scmp.eq.s32.totalorder %s14, 0
    %p36 = por %p34, %p35
    %s37 = ssub.s32 %s8, %s15
    %p38 = scmp.eq.s32.totalorder %s37, 0
    %s40 = sadd.s32 %s39, 1
    %s41 = scalar_select %p38, %s39, %s40
    %p44 = pneg %p38
    %p45 = scmp.eq.s32.totalorder %s8, 1
    %p46 = por %p44, %p45
    %p47 = scmp.ne.s32.totalorder %s39, %s42
    %p48 = scmp.eq.s32.totalorder %s8, 0
    %p49 = por %p47, %p48
    %p50 = scmp.ne.s32.totalorder %s39, %s42
    %p51 = scmp.eq.s32.totalorder %s13, 1
    %p52 = por %p50, %p51
    %p53 = scmp.ne.s32.totalorder %s42, %s43
    %p54 = scmp.eq.s32.totalorder %s13, 0
    %p55 = por %p53, %p54
    %p56 = scmp.ne.s32.totalorder %s42, %s43
    %p57 = scmp.eq.s32.totalorder %s14, 1
    %p58 = por %p56, %p57
    %p60 = scmp.ne.s32.totalorder %s43, %s59
    %p61 = scmp.eq.s32.totalorder %s14, 0
    %p62 = por %p60, %p61
    %s63 = ssub.s32 %s8, %s15
    %p64 = scmp.eq.s32.totalorder %s63, 0
    %s66 = sadd.s32 %s65, 1
    %s67 = scalar_select %p64, %s65, %s66
    %p70 = pneg %p64
    %p71 = scmp.eq.s32.totalorder %s8, 1
    %p72 = por %p70, %p71
    %p73 = scmp.ne.s32.totalorder %s65, %s68
    %p74 = scmp.eq.s32.totalorder %s8, 0
    %p75 = por %p73, %p74
    %p76 = scmp.ne.s32.totalorder %s65, %s68
    %p77 = scmp.eq.s32.totalorder %s13, 1
    %p78 = por %p76, %p77
    %p79 = scmp.ne.s32.totalorder %s68, %s69
    %p80 = scmp.eq.s32.totalorder %s13, 0
    %p81 = por %p79, %p80
    %p82 = scmp.ne.s32.totalorder %s68, %s69
    %p83 = scmp.eq.s32.totalorder %s14, 1
    %p84 = por %p82, %p83
    %p86 = scmp.ne.s32.totalorder %s69, %s85
    %p87 = scmp.eq.s32.totalorder %s14, 0
    %p88 = por %p86, %p87
    %p89 = scmp.le.s32.totalorder 1, %s8
    %p90 = scmp.lt.s32.totalorder %s8, 3
    %p91 = pnand %p89, %p90
    %p92 = pneg %p91
    // Predicated region
    $region9: #{loss_forward.2} parent=5 // pred_check
      _
    $region10: #{loss_forward.2} parent=5 // pred_check_branch
      %94 = sbr.rel (%p91) target = $region12
    $region11: #{loss_forward.2} parent=5 // pred_region
      %s95 = ssub.s32 %s8, 1
      // Predicated region
      $region13: #{loss_forward.2} parent=11 // pred_check
        %p96 = pneg %p29
      $region14: #{loss_forward.2} parent=11 // pred_check_branch
        %98 = sbr.rel (%p96) target = $region16
      $region15: #{loss_forward.2} parent=11 // pred_region
        _
      $region16: #{loss_forward.2} parent=11 // pred_fallthru
        _
    $region12: #{loss_forward.2} parent=5 // pred_fallthru
      _
    %p99 = scmp.lt.s32.totalorder %s8, 2
    // Predicated region
    $region17: #{loss_forward.2} parent=5 // pred_check
      %p100 = pneg %p99
    $region18: #{loss_forward.2} parent=5 // pred_check_branch
      %102 = sbr.rel (%p100) target = $region20
    $region19: #{loss_forward.2} parent=5 // pred_region
      // Predicated region
      $region21: #{loss_forward.2} parent=19 // pred_check
        %p103 = pneg %p49
      $region22: #{loss_forward.2} parent=19 // pred_check_branch
        %105 = sbr.rel (%p103) target = $region24
      $region23: #{loss_forward.2} parent=19 // pred_region
        %p106 = scmp.lt.s32.totalorder %s8, 1
        %s107 = scalar_select %p106, %s8, 1
        %s108 = smul.addr %s107, 12
        %s109 = smul.addr %s108, 8
        %s110 = scalar_lea.vmem %s1, %s109
      $region24: #{loss_forward.2} parent=19 // pred_fallthru
        _
    $region20: #{loss_forward.2} parent=5 // pred_fallthru
      _
    %p111 = scmp.le.s32.totalorder 1, %s8
    %p112 = scmp.lt.s32.totalorder %s8, 3
    %p113 = pnand %p111, %p112
    %p114 = pneg %p113
    // Predicated region
    $region25: #{loss_forward.2} parent=5 // pred_check
      _
    $region26: #{loss_forward.2} parent=5 // pred_check_branch
      %116 = sbr.rel (%p113) target = $region28
    $region27: #{loss_forward.2} parent=5 // pred_region
      %s117 = ssub.s32 %s8, 1
      %p118 = pneg %p29
      %p119 = pneg %p26
      %p120 = scmp.lt.s32.totalorder %s13, 1
      %s121 = scalar_select %p120, %s13, 1
      %s122 = smul.addr %s121, 12
      %s123 = smul.addr %s122, 8
      %s124 = scalar_lea.vmem %s1, %s123
      %p125 = pneg %p55
      %p126 = pneg %p52
      %p127 = pneg %p81
      %p128 = pneg %p78
      %p129 = scmp.lt.s32.totalorder %s13, 1
      %s130 = scalar_select %p129, %s13, 1
      %s131 = smul.addr %s130, 4
      %s132 = scalar_lea.vmem %s2, %s131
      %p133 = scmp.lt.s32.totalorder %s13, 1
      %s134 = scalar_select %p133, %s13, 1
      %s135 = smul.addr %s134, 12
      %s136 = smul.addr %s135, 8
      %s137 = scalar_lea.vmem %s1, %s136
      %p138 = scmp.lt.s32.totalorder %s13, 1
      %s139 = scalar_select %p138, %s13, 1
      %s140 = smul.addr %s139, 4
      %s141 = scalar_lea.vmem %s2, %s140
      %v142 = vld [vmem:[%s0] sm:$0xff]
      %v143 = vld [vmem:[%s0 + $0x8] sm:$0xff]
      %v144 = vld [vmem:[%s0 + $0x10] sm:$0xff]
      %v145 = vld [vmem:[%s137] sm:$0xff]
      %v146 = vld [vmem:[%s137 + $0x8] sm:$0xff]
      %v147 = vld [vmem:[%s137 + $0x10] sm:$0xff]
      %v148 = vld [vmem:[%s137 + $0x18] sm:$0xff]
      %v149 = vld [vmem:[%s137 + $0x20] sm:$0xff]
      %v150 = vld [vmem:[%s137 + $0x28] sm:$0xff]
      %v151 = vld [vmem:[%s137 + $0x30] sm:$0x3]
      %v152 = vld [vmem:[%s137 + $0x38] sm:$0x3]
      %v153 = vld [vmem:[%s137 + $0x40] sm:$0x3]
      %v154 = vld [vmem:[%s137 + $0x48] sm:$0x3]
      %v155 = vld [vmem:[%s137 + $0x50] sm:$0x3]
      %v156 = vld [vmem:[%s137 + $0x58] sm:$0x3]
      %v160 = vcombine.high %v142, %v142
      %v161 = vcombine.high %v143, %v143
      %v162 = vcombine.high %v144, %v144
      %166 = vmatprep.subr.mxu0 %v146
      %167 = vmatpush1.xpose.msra.mxu0 %v145
      %168 = vmatprep.subr.mxu0 %v152
      %169 = vmatpush1.xpose.msra.mxu0 %v151
      %170 = vmatprep.subr.mxu0 0.0
      %171 = vmatpush1.xpose.msra.mxu0 0.0
      %172 = vmatprep.subr.mxu0 0.0
      %173 = vmatpush1.xpose.msra.mxu0 0.0
      %174 = vmatprep.subr.mxu0 0.0
      %175 = vmatpush1.xpose.msra.mxu0 0.0
      %176 = vmatprep.subr.mxu0 0.0
      %177 = vmatpush1.xpose.msra.mxu0 0.0
      %178 = vmatprep.subr.mxu0 0.0
      %179 = vmatpush1.xpose.msra.mxu0 0.0
      %180 = vmatprep.subr.mxu0 0.0
      %181 = vmatpush1.xpose.msra.mxu0 0.0
      %182 = vmatprep.subr.mxu0 0.0
      %183 = vmatpush1.xpose.msra.mxu0 0.0
      %184 = vmatprep.subr.mxu0 0.0
      %185 = vmatpush1.xpose.msra.mxu0 0.0
      %186 = vmatprep.subr.mxu0 0.0
      %187 = vmatpush1.xpose.msra.mxu0 0.0
      %188 = vmatprep.subr.mxu0 0.0
      %189 = vmatpush1.xpose.msra.mxu0 0.0
      %190 = vmatprep.subr.mxu0 0.0
      %191 = vmatpush1.xpose.msra.mxu0 0.0
      %192 = vmatprep.subr.mxu0 0.0
      %193 = vmatpush1.xpose.msra.mxu0 0.0
      %194 = vmatprep.subr.mxu0 0.0
      %195 = vmatpush1.xpose.msra.mxu0 0.0
      %196 = vmatprep.subr.mxu0 0.0
      %197 = vmatpush1.xpose.msra.mxu0 0.0
      %198 = vmatprep.subr.mxu0 0.0
      %199 = vmatpush1.xpose.msra.mxu0 0.0
      %200 = vmatprep.subr.mxu0 0.0
      %201 = vmatpush1.xpose.msra.mxu0 0.0
      %202 = vmatprep.subr.mxu0 0.0
      %203 = vmatpush1.xpose.msra.mxu0 0.0
      %204 = vmatprep.subr.mxu0 0.0
      %205 = vmatpush1.xpose.msra.mxu0 0.0
      %206 = vmatprep.subr.mxu0 0.0
      %207 = vmatpush1.xpose.msra.mxu0 0.0
      %208 = vmatprep.subr.mxu0 0.0
      %209 = vmatpush1.xpose.msra.mxu0 0.0
      %210 = vmatprep.subr.mxu0 0.0
      %211 = vmatpush1.xpose.msra.mxu0 0.0
      %212 = vmatprep.subr.mxu0 0.0
      %213 = vmatpush1.xpose.msra.mxu0 0.0
      %214 = vmatprep.subr.mxu0 0.0
      %215 = vmatpush1.xpose.msra.mxu0 0.0
      %216 = vmatprep.subr.mxu0 0.0
      %217 = vmatpush1.xpose.msra.mxu0 0.0
      %218 = vmatprep.subr.mxu0 0.0
      %219 = vmatpush1.xpose.msra.mxu0 0.0
      %220 = vmatprep.subr.mxu0 0.0
      %221 = vmatpush1.xpose.msra.mxu0 0.0
      %222 = vmatprep.subr.mxu0 0.0
      %223 = vmatpush1.xpose.msra.mxu0 0.0
      %224 = vmatprep.subr.mxu0 0.0
      %225 = vmatpush1.xpose.msra.mxu0 0.0
      %226 = vmatprep.subr.mxu0 0.0
      %227 = vmatpush1.xpose.msra.mxu0 0.0
      %228 = vmatprep.subr.mxu0 0.0
      %229 = vmatpush1.xpose.msra.mxu0 0.0
      %230 = vmatprep.mubr.f32.mxu0 %v160
      %231 = vmatmul.mubr.f32.gmra.mrb[0].mxu0 %v142
      %v232 = vpop.f32.mrb[0].mxu0
      %v233 = vadd.f32 0.0, %v232
      %v234 = vpop.f32.mrb[0].mxu0
      %235 = vdwg.mxu0
      %236 = vmatprep.subr.mxu0 %v148
      %237 = vmatpush1.xpose.msra.mxu0 %v147
      %238 = vmatprep.subr.mxu0 %v154
      %239 = vmatpush1.xpose.msra.mxu0 %v153
      %240 = vmatprep.subr.mxu0 0.0
      %241 = vmatpush1.xpose.msra.mxu0 0.0
      %242 = vmatprep.subr.mxu0 0.0
      %243 = vmatpush1.xpose.msra.mxu0 0.0
      %244 = vmatprep.subr.mxu0 0.0
      %245 = vmatpush1.xpose.msra.mxu0 0.0
      %246 = vmatprep.subr.mxu0 0.0
      %247 = vmatpush1.xpose.msra.mxu0 0.0
      %248 = vmatprep.subr.mxu0 0.0
      %249 = vmatpush1.xpose.msra.mxu0 0.0
      %250 = vmatprep.subr.mxu0 0.0
      %251 = vmatpush1.xpose.msra.mxu0 0.0
      %252 = vmatprep.subr.mxu0 0.0
      %253 = vmatpush1.xpose.msra.mxu0 0.0
      %254 = vmatprep.subr.mxu0 0.0
      %255 = vmatpush1.xpose.msra.mxu0 0.0
      %256 = vmatprep.subr.mxu0 0.0
      %257 = vmatpush1.xpose.msra.mxu0 0.0
      %258 = vmatprep.subr.mxu0 0.0
      %259 = vmatpush1.xpose.msra.mxu0 0.0
      %260 = vmatprep.subr.mxu0 0.0
      %261 = vmatpush1.xpose.msra.mxu0 0.0
      %262 = vmatprep.subr.mxu0 0.0
      %263 = vmatpush1.xpose.msra.mxu0 0.0
      %264 = vmatprep.subr.mxu0 0.0
      %265 = vmatpush1.xpose.msra.mxu0 0.0
      %266 = vmatprep.subr.mxu0 0.0
      %267 = vmatpush1.xpose.msra.mxu0 0.0
      %268 = vmatprep.subr.mxu0 0.0
      %269 = vmatpush1.xpose.msra.mxu0 0.0
      %270 = vmatprep.subr.mxu0 0.0
      %271 = vmatpush1.xpose.msra.mxu0 0.0
      %272 = vmatprep.subr.mxu0 0.0
      %273 = vmatpush1.xpose.msra.mxu0 0.0
      %274 = vmatprep.subr.mxu0 0.0
      %275 = vmatpush1.xpose.msra.mxu0 0.0
      %276 = vmatprep.subr.mxu0 0.0
      %277 = vmatpush1.xpose.msra.mxu0 0.0
      %278 = vmatprep.subr.mxu0 0.0
      %279 = vmatpush1.xpose.msra.mxu0 0.0
      %280 = vmatprep.subr.mxu0 0.0
      %281 = vmatpush1.xpose.msra.mxu0 0.0
      %282 = vmatprep.subr.mxu0 0.0
      %283 = vmatpush1.xpose.msra.mxu0 0.0
      %284 = vmatprep.subr.mxu0 0.0
      %285 = vmatpush1.xpose.msra.mxu0 0.0
      %286 = vmatprep.subr.mxu0 0.0
      %287 = vmatpush1.xpose.msra.mxu0 0.0
      %288 = vmatprep.subr.mxu0 0.0
      %289 = vmatpush1.xpose.msra.mxu0 0.0
      %290 = vmatprep.subr.mxu0 0.0
      %291 = vmatpush1.xpose.msra.mxu0 0.0
      %292 = vmatprep.subr.mxu0 0.0
      %293 = vmatpush1.xpose.msra.mxu0 0.0
      %294 = vmatprep.subr.mxu0 0.0
      %295 = vmatpush1.xpose.msra.mxu0 0.0
      %296 = vmatprep.subr.mxu0 0.0
      %297 = vmatpush1.xpose.msra.mxu0 0.0
      %298 = vmatprep.subr.mxu0 0.0
      %299 = vmatpush1.xpose.msra.mxu0 0.0
      %300 = vmatprep.mubr.f32.mxu0 %v161
      %301 = vmatmul.mubr.f32.gmra.mrb[0].mxu0 %v143
      %v302 = vpop.f32.mrb[0].mxu0
      %v303 = vadd.f32 %v233, %v302
      %v304 = vpop.f32.mrb[0].mxu0
      %305 = vdwg.mxu0
      %306 = vmatprep.subr.mxu0 %v150
      %307 = vmatpush1.xpose.msra.mxu0 %v149
      %308 = vmatprep.subr.mxu0 %v156
      %309 = vmatpush1.xpose.msra.mxu0 %v155
      %310 = vmatprep.subr.mxu0 0.0
      %311 = vmatpush1.xpose.msra.mxu0 0.0
      %312 = vmatprep.subr.mxu0 0.0
      %313 = vmatpush1.xpose.msra.mxu0 0.0
      %314 = vmatprep.subr.mxu0 0.0
      %315 = vmatpush1.xpose.msra.mxu0 0.0
      %316 = vmatprep.subr.mxu0 0.0
      %317 = vmatpush1.xpose.msra.mxu0 0.0
      %318 = vmatprep.subr.mxu0 0.0
      %319 = vmatpush1.xpose.msra.mxu0 0.0
      %320 = vmatprep.subr.mxu0 0.0
      %321 = vmatpush1.xpose.msra.mxu0 0.0
      %322 = vmatprep.subr.mxu0 0.0
      %323 = vmatpush1.xpose.msra.mxu0 0.0
      %324 = vmatprep.subr.mxu0 0.0
      %325 = vmatpush1.xpose.msra.mxu0 0.0
      %326 = vmatprep.subr.mxu0 0.0
      %327 = vmatpush1.xpose.msra.mxu0 0.0
      %328 = vmatprep.subr.mxu0 0.0
      %329 = vmatpush1.xpose.msra.mxu0 0.0
      %330 = vmatprep.subr.mxu0 0.0
      %331 = vmatpush1.xpose.msra.mxu0 0.0
      %332 = vmatprep.subr.mxu0 0.0
      %333 = vmatpush1.xpose.msra.mxu0 0.0
      %334 = vmatprep.subr.mxu0 0.0
      %335 = vmatpush1.xpose.msra.mxu0 0.0
      %336 = vmatprep.subr.mxu0 0.0
      %337 = vmatpush1.xpose.msra.mxu0 0.0
      %338 = vmatprep.subr.mxu0 0.0
      %339 = vmatpush1.xpose.msra.mxu0 0.0
      %340 = vmatprep.subr.mxu0 0.0
      %341 = vmatpush1.xpose.msra.mxu0 0.0
      %342 = vmatprep.subr.mxu0 0.0
      %343 = vmatpush1.xpose.msra.mxu0 0.0
      %344 = vmatprep.subr.mxu0 0.0
      %345 = vmatpush1.xpose.msra.mxu0 0.0
      %346 = vmatprep.subr.mxu0 0.0
      %347 = vmatpush1.xpose.msra.mxu0 0.0
      %348 = vmatprep.subr.mxu0 0.0
      %349 = vmatpush1.xpose.msra.mxu0 0.0
      %350 = vmatprep.subr.mxu0 0.0
      %351 = vmatpush1.xpose.msra.mxu0 0.0
      %352 = vmatprep.subr.mxu0 0.0
      %353 = vmatpush1.xpose.msra.mxu0 0.0
      %354 = vmatprep.subr.mxu0 0.0
      %355 = vmatpush1.xpose.msra.mxu0 0.0
      %356 = vmatprep.subr.mxu0 0.0
      %357 = vmatpush1.xpose.msra.mxu0 0.0
      %358 = vmatprep.subr.mxu0 0.0
      %359 = vmatpush1.xpose.msra.mxu0 0.0
      %360 = vmatprep.subr.mxu0 0.0
      %361 = vmatpush1.xpose.msra.mxu0 0.0
      %362 = vmatprep.subr.mxu0 0.0
      %363 = vmatpush1.xpose.msra.mxu0 0.0
      %364 = vmatprep.subr.mxu0 0.0
      %365 = vmatpush1.xpose.msra.mxu0 0.0
      %366 = vmatprep.subr.mxu0 0.0
      %367 = vmatpush1.xpose.msra.mxu0 0.0
      %368 = vmatprep.subr.mxu0 0.0
      %369 = vmatpush1.xpose.msra.mxu0 0.0
      %370 = vmatprep.mubr.f32.mxu0 %v162
      %371 = vmatmul.mubr.f32.gmra.mrb[0].mxu0 %v144
      %v372 = vpop.f32.mrb[0].mxu0
      %v373 = vadd.f32 %v303, %v372
      %v374 = vpop.f32.mrb[0].mxu0
      %375 = vdwg.mxu0
      %vm376 = vcmask 76800
      %377 = vst.msk [vmem:[%s141] sm:$0xf] %vm376, %v373
      %p378 = scmp.lt.s32.totalorder %s13, 1
      %s379 = scalar_select %p378, %s13, 1
      %s380 = smul.addr %s379, 4
      %s381 = scalar_lea.vmem %s2, %s380
      // Predicated region
      $region29: #{loss_forward.2} parent=27 // pred_check
        %p382 = pneg %p78
      $region30: #{loss_forward.2} parent=27 // pred_check_branch
        %384 = sbr.rel (%p382) target = $region32
      $region31: #{loss_forward.2} parent=27 // pred_region
        _
      $region32: #{loss_forward.2} parent=27 // pred_fallthru
        _
    $region28: #{loss_forward.2} parent=5 // pred_fallthru
      _
    %p385 = scmp.le.s32.totalorder 2, %s8
    // Predicated region
    $region33: #{loss_forward.2} parent=5 // pred_check
      %p386 = pneg %p385
    $region34: #{loss_forward.2} parent=5 // pred_check_branch
      %388 = sbr.rel (%p386) target = $region36
    $region35: #{loss_forward.2} parent=5 // pred_region
      %s389 = ssub.s32 %s8, 2
      // Predicated region
      $region37: #{loss_forward.2} parent=35 // pred_check
        %p390 = pneg %p84
      $region38: #{loss_forward.2} parent=35 // pred_check_branch
        %392 = sbr.rel (%p390) target = $region40
      $region39: #{loss_forward.2} parent=35 // pred_region
        %p393 = scmp.lt.s32.totalorder %s14, 1
        %s394 = scalar_select %p393, %s14, 1
        %s395 = smul.addr %s394, 4
        %s396 = scalar_lea.vmem %s2, %s395
      $region40: #{loss_forward.2} parent=35 // pred_fallthru
        _
    $region36: #{loss_forward.2} parent=5 // pred_fallthru
      _
  $region6: #{loss_forward.2} parent=0 // loop_footer
    %s12 = sadd.s32 1, %s8
  $region7: #{loss_forward.2} parent=0 // loop_footer_branch
    %7 = sbr.rel target = $region3
  $region8: #{loss_forward.2} parent=0 // loop_exit
    _

// kernel: loss_forward.3
$region0: #{loss_forward.3}
  #allocation0 [shape = 'u32[]', space=smem, size = 0x4, offset = 0x4, fixed_abs, tag = 'smem constant byte address 0x4 - core index']
  #allocation1 [shape = 'u32[144,128]{1,0:T(1,128)}', space=vmem, size = 0x12000, scoped, tag = 'internal scratch']
  %s0 = inlined_call_operand.vmem [shape: f32[2,256], index: 0, kind: input, shape index: {}]
  %s1 = inlined_call_operand.vmem [shape: f32[3,2,256], index: 1, kind: input, shape index: {}]
  %s2 = inlined_call_operand.vmem [shape: f32[2,1], index: 2, kind: output, shape index: {0}]
  %s3 = inlined_call_operand.vmem [shape: f32[2,1], index: 3, kind: output, shape index: {1}]
  %4 = xla_tuple %s2, %s3
  %s5 = sld [smem:[#allocation0]]
  $region26: #{loss_forward.3} parent=0
    _
  %s7 = ssub.s32 1, %s5
  %s8 = scalar_select 0, %s7, %s5
  // Predicated region
  $region2: #{loss_forward.3} parent=0 // pred_check
    _
  $region3: #{loss_forward.3} parent=0 // pred_check_branch
    %10 = sbr.rel (0) target = $region5
  $region4: #{loss_forward.3} parent=0 // pred_region
    _
  $region5: #{loss_forward.3} parent=0 // pred_fallthru
    _
  // Predicated region
  $region6: #{loss_forward.3} parent=0 // pred_check
    _
  $region7: #{loss_forward.3} parent=0 // pred_check_branch
    %12 = sbr.rel (0) target = $region9
  $region8: #{loss_forward.3} parent=0 // pred_region
    _
  $region9: #{loss_forward.3} parent=0 // pred_fallthru
    _
  %v13 = vld [vmem:[%s0] sm:$0xf]
  %v14 = vld [vmem:[%s1] sm:$0xf]
  %v15 = vand.u32 2147483647, %v14
  %v16 = vrcp.pop 3.0
  %v17 = vmul.f32 %v15, %v16
  %s18 = scalar_lea.vmem %s1, 4
  %v19 = vld [vmem:[%s18] sm:$0xf]
  %v20 = vand.u32 2147483647, %v19
  %v21 = vmul.f32 %v20, %v16
  %v22 = vadd.f32 %v17, %v21
  %s23 = scalar_lea.vmem %s1, 8
  %v24 = vld [vmem:[%s23] sm:$0xf]
  %v25 = vand.u32 2147483647, %v24
  %v26 = vmul.f32 %v25, %v16
  %v27 = vadd.f32 %v22, %v26
  %v30 = vunpack.c.l.s4 1983009808
  %v31 = vunpack.c.0.s8 %v30
  %v32 = vlaneseq
  %v33 = vshrl.u32 %v32, 7
  %v34 = vsub.s32 %v31, %v33
  %v35 = vrot.slane %v13, %v34
  %v36 = vcombine.high %v35, %v35
  %vm39 = vcmask 1041408
  %v40 = vsel %vm39, %v35, 0.0
  %v41 = vsel %vm39, %v36, 0.0
  %v42 = vadd.f32 %v40, %v41
  %43 = vadd.xlane.f32.xlu0 %v42
  %v44 = vpop.xlane.xlu0 %43
  %v45 = vrcp.pop 256.0
  %v46 = vmul.f32 %v44, %v45
  %v47 = vsub.f32 1.0, %v46
  %v50 = vunpack.c.l.s4 1983009808
  %v51 = vunpack.c.0.s8 %v50
  %v52 = vlaneseq
  %v53 = vshrl.u32 %v52, 7
  %v54 = vsub.s32 %v51, %v53
  %v55 = vrot.slane %v27, %v54
  %v56 = vcombine.high %v55, %v55
  %v59 = vsel %vm39, %v55, 0.0
  %v60 = vsel %vm39, %v56, 0.0
  %v61 = vadd.f32 %v59, %v60
  %62 = vadd.xlane.f32.xlu0 %v61
  %v63 = vpop.xlane.xlu0 %62
  %v64 = vmul.f32 %v63, %v45
  %v65 = vmul.f32 %v47, %v47
  %v66 = vmul.f32 %v64, %v64
  %v67 = vadd.f32 %v65, %v66
  %v68 = vadd.f32 %v67, 1e-10
  %v69 = vmul.f32 %v47, 2.0
  %v70 = vmul.f32 %v69, %v64
  %v71 = vadd.f32 %v70, 1e-10
  %v72 = vrcp.pop %v71
  %v73 = vmul.f32 %v68, %v72
  %v74 = vlog2.pop %v73
  %v75 = vmul.f32 %v74, 0.6931472
  %vm76 = vcmask 1024
  %77 = vst.msk [vmem:[%s2] sm:$0x3] %vm76, %v75
  %v78 = vsel %vm39, %v35, -inf
  %v79 = vsel %vm39, %v36, -inf
  %v80 = vmax.f32 %v78, %v79
  %81 = vmax.xlane.f32.xlu0 %v80
  %v82 = vpop.xlane.xlu0 %81
  %v85 = vunpack.c.l.s4 269488144
  %v86 = vunpack.c.0.s8 %v85
  %v87 = vlaneseq
  %v88 = vshrl.u32 %v87, 7
  %v89 = vsub.s32 %v86, %v88
  %v90 = vrot.slane %v82, %v89
  %v92 = vsub.f32 %v13, %v90
  %v93 = vmul.f32 %v92, 1.442695
  %v94 = vpow.pop %v93
  %v97 = vunpack.c.l.s4 1983009808
  %v98 = vunpack.c.0.s8 %v97
  %v99 = vlaneseq
  %v100 = vshrl.u32 %v99, 7
  %v101 = vsub.s32 %v98, %v100
  %v102 = vrot.slane %v94, %v101
  %v103 = vcombine.high %v102, %v102
  %v106 = vsel %vm39, %v102, 0.0
  %v107 = vsel %vm39, %v103, 0.0
  %v108 = vadd.f32 %v106, %v107
  %109 = vadd.xlane.f32.xlu0 %v108
  %v110 = vpop.xlane.xlu0 %109
  %v113 = vunpack.c.l.s4 269488144
  %v114 = vunpack.c.0.s8 %v113
  %v115 = vlaneseq
  %v116 = vshrl.u32 %v115, 7
  %v117 = vsub.s32 %v114, %v116
  %v118 = vrot.slane %v110, %v117
  %v120 = vrcp.pop %v118
  %v121 = vmul.f32 %v94, %v120
  %v122 = vmul.f32 %v121, %v27
  %v125 = vunpack.c.l.s4 1983009808
  %v126 = vunpack.c.0.s8 %v125
  %v127 = vlaneseq
  %v128 = vshrl.u32 %v127, 7
  %v129 = vsub.s32 %v126, %v128
  %v130 = vrot.slane %v122, %v129
  %v131 = vcombine.high %v130, %v130
  %v134 = vsel %vm39, %v130, 0.0
  %v135 = vsel %vm39, %v131, 0.0
  %v136 = vadd.f32 %v134, %v135
  %137 = vadd.xlane.f32.xlu0 %v136
  %v138 = vpop.xlane.xlu0 %137
  %139 = vst.msk [vmem:[%s3] sm:$0x3] %vm76, %v138
  // Predicated region
  $region10: #{loss_forward.3} parent=0 // pred_check
    _
  $region11: #{loss_forward.3} parent=0 // pred_check_branch
    %141 = sbr.rel (0) target = $region13
  $region12: #{loss_forward.3} parent=0 // pred_region
    _
  $region13: #{loss_forward.3} parent=0 // pred_fallthru
    _
  // Predicated region
  $region14: #{loss_forward.3} parent=0 // pred_check
    _
  $region15: #{loss_forward.3} parent=0 // pred_check_branch
    %143 = sbr.rel (0) target = $region17
  $region16: #{loss_forward.3} parent=0 // pred_region
    _
  $region17: #{loss_forward.3} parent=0 // pred_fallthru
    _
  // Predicated region
  $region18: #{loss_forward.3} parent=0 // pred_check
    _
  $region19: #{loss_forward.3} parent=0 // pred_check_branch
    %145 = sbr.rel (0) target = $region21
  $region20: #{loss_forward.3} parent=0 // pred_region
    _
  $region21: #{loss_forward.3} parent=0 // pred_fallthru
    _
  // Predicated region
  $region22: #{loss_forward.3} parent=0 // pred_check
    _
  $region23: #{loss_forward.3} parent=0 // pred_check_branch
    %147 = sbr.rel (0) target = $region25
  $region24: #{loss_forward.3} parent=0 // pred_region
    _
  $region25: #{loss_forward.3} parent=0 // pred_fallthru
    _

</llo_original>
